<compile_context>
chip_gen: v6e
topology: v6e:2x2x1
jax: 0.10.0
libtpu: 0.0.40
codegen_flags: <defaults>
</compile_context>

<pallas_src>
import functools
import math

import jax
import jax.numpy as jnp
import numpy as np
from jax.experimental import pallas as pl
from jax.experimental.pallas import tpu as pltpu

EPS = 1e-5  # nn.InstanceNorm2d default


def adain_kernel(x_ref, sb_ref, o_ref, *, inv_hw):
    """One grid step: TC flattened (n, c) instances x the full HW extent.

    x_ref  : (TC, HW)  activations (f32 or bf16)
    sb_ref : (TC, 2)   f32 per-row [ys + 1, yb]
    o_ref  : (TC, HW)  output, same dtype as x
    """
    # --- stats pass: single-pass mean / biased variance in f32 ---
    xf = x_ref[...].astype(jnp.float32)                      # (TC, HW)
    sum_x = jnp.sum(xf, axis=-1, keepdims=True)              # (TC, 1)
    sum_x2 = jnp.sum(xf * xf, axis=-1, keepdims=True)        # (TC, 1)
    mean = sum_x * inv_hw
    var = jnp.maximum(sum_x2 * inv_hw - mean * mean, 0.0)
    inv = jax.lax.rsqrt(var + EPS)                           # (TC, 1)

    # out = (1+ys) * (x - mean) * inv + yb  ==  x * a + b
    a = inv * sb_ref[:, 0:1]                                 # (TC, 1)
    b = sb_ref[:, 1:2] - mean * a                            # (TC, 1)

    # --- store pass: re-read x_ref; only a/b are live across the two passes ---
    if o_ref.dtype == jnp.float32:
        o_ref[...] = x_ref[...].astype(jnp.float32) * a + b
    else:
        # bf16 output FMA: keep the store path at the streaming dtype.
        o_ref[...] = x_ref[...] * a.astype(o_ref.dtype) + b.astype(o_ref.dtype)


def _choose_row_tile(rows, hw, itemsize, budget_bytes=4 << 20):
    """Largest multiple-of-8 divisor of `rows` whose (TC, HW) block fits the
    per-block budget.  Falls back to 8 (smallest legal multiple-of-8 tile) and
    to the full row extent when rows is not a multiple of 8 (block dim ==
    array dim is always legal)."""
    if rows % 8 != 0:
        return rows
    best = 8
    d = 8
    while d <= rows:
        if rows % d == 0 and d * hw * itemsize <= budget_bytes:
            best = d
        d += 8
    return best


def adain_forward(x_nchw, style_nc11, weight, bias, scale, lrmul):
    """AdaIN forward.

    x_nchw     : (N, C, H, W)   activations (f32 or bf16)
    style_nc11 : (N, S, 1, 1)   style vector
    weight     : (2C, S, 1, 1)  torch 1x1-conv weight of the style affine
    bias       : (2C,)          conv bias
    scale, lrmul: WeightScaledConv scalars
    """
    N, C, H, W = x_nchw.shape
    S = style_nc11.shape[1]
    HW = H * W
    rows = N * C

    # ---- style affine (degenerate 1x1 conv), hoisted to XLA ----
    w2d = weight.reshape(2 * C, S).astype(jnp.float32) * scale            # (2C, S)
    y = (style_nc11.reshape(N, S).astype(jnp.float32) @ w2d.T
         + bias.astype(jnp.float32) * lrmul)                              # (N, 2C)
    ys1 = y[:, :C] + 1.0                                                  # (N, C)
    yb = y[:, C:]                                                         # (N, C)
    sb = jnp.stack([ys1, yb], axis=-1).reshape(rows, 2)                   # (rows, 2)

    # ---- flatten (N, C) -> rows; no pad, no post-slice ----
    x = x_nchw.reshape(rows, HW)
    itemsize = x.dtype.itemsize

    TC = _choose_row_tile(rows, HW, itemsize)
    grid = (rows // TC,)

    # VMEM budget from the actual working set: double-buffered in + out blocks
    # plus headroom for f32 intermediates and the tiny style block.
    block_bytes = TC * HW * itemsize
    working = 4 * block_bytes + TC * HW * 4 + (2 << 20)
    vmem_limit = int(min(max(working, 8 << 20), 64 << 20))

    kernel = functools.partial(adain_kernel, inv_hw=1.0 / HW)

    out = pl.pallas_call(
        kernel,
        out_shape=jax.ShapeDtypeStruct((rows, HW), x.dtype),
        grid_spec=pltpu.PrefetchScalarGridSpec(
            num_scalar_prefetch=0,
            grid=grid,
            in_specs=[
                pl.BlockSpec((TC, HW), lambda i: (i, 0)),
                pl.BlockSpec((TC, 2), lambda i: (i, 0)),
            ],
            out_specs=pl.BlockSpec((TC, HW), lambda i: (i, 0)),
        ),
        compiler_params=pltpu.CompilerParams(
            dimension_semantics=("parallel",),
            vmem_limit_bytes=vmem_limit,
        ),
    )(x, sb)

    return out.reshape(N, C, H, W)


def adain_reference(x, style, weight, bias, scale, lrmul):
    """Pure-JAX reference mirroring the PyTorch module."""
    N, C, H, W = x.shape
    S = style.shape[1]
    w2d = weight.reshape(2 * C, S) * scale                    # (2C, S)
    y = style.reshape(N, S) @ w2d.T + bias * lrmul            # (N, 2C)
    ys, yb = y[:, :C], y[:, C:]
    mean = x.mean(axis=(2, 3), keepdims=True)
    var = ((x - mean) ** 2).mean(axis=(2, 3), keepdims=True)  # biased
    xn = (x - mean) / jnp.sqrt(var + EPS)
    return (ys[:, :, None, None] + 1.0) * xn + yb[:, :, None, None]


if __name__ == "__main__":
    def make_case(key, N, C, S, H, W, lrmul=1.0, dtype=jnp.float32):
        k_x, k_s, k_w = jax.random.split(key, 3)
        x = jax.random.normal(k_x, (N, C, H, W), dtype=jnp.float32).astype(dtype)
        style = jax.random.normal(k_s, (N, S, 1, 1), dtype=jnp.float32)
        # WeightScaledConv(use_scale=True): he_std = sqrt(1/(S*1*1)),
        # init_std = 1/lrmul, scale = he_std*lrmul, bias zero-init.
        he_std = math.sqrt(1.0 / (S * 1 * 1))
        init_std = 1.0 / lrmul
        scale = he_std * lrmul
        weight = jax.random.normal(k_w, (2 * C, S, 1, 1),
                                   dtype=jnp.float32) * init_std
        bias = jnp.zeros((2 * C,), dtype=jnp.float32)
        return x, style, weight, bias, scale, lrmul

    key = jax.random.PRNGKey(0)
    k0, k1, k2, k3 = jax.random.split(key, 4)

    # Case 1: canonical small shape (rows = 8, HW = 256, lane-dense).
    x, style, w, b, scale, lrmul = make_case(k0, N=2, C=4, S=8, H=16, W=16)
    out = jax.block_until_ready(adain_forward(x, style, w, b, scale, lrmul))
    ref = adain_reference(x, style, w, b, scale, lrmul)
    np.testing.assert_allclose(np.asarray(out), np.asarray(ref),
                               rtol=1e-5, atol=1e-5)

    # Case 2: HW not a multiple of 128 (exercises masked edge stores, no pad)
    # with a multiple-of-8 row count (exercises row tiling).
    x, style, w, b, scale, lrmul = make_case(k1, N=2, C=16, S=8, H=6, W=6)
    out = jax.block_until_ready(adain_forward(x, style, w, b, scale, lrmul))
    ref = adain_reference(x, style, w, b, scale, lrmul)
    np.testing.assert_allclose(np.asarray(out), np.asarray(ref),
                               rtol=1e-5, atol=1e-5)

    # Case 3: bf16 activation streaming (f32 stats, bf16 output FMA).
    x, style, w, b, scale, lrmul = make_case(k2, N=2, C=8, S=8, H=16, W=16,
                                             dtype=jnp.bfloat16)
    out = jax.block_until_ready(adain_forward(x, style, w, b, scale, lrmul))
    ref = adain_reference(x.astype(jnp.float32), style, w, b, scale, lrmul)
    np.testing.assert_allclose(np.asarray(out, dtype=np.float32),
                               np.asarray(ref), rtol=5e-2, atol=1e-1)

    # Case 4: rows not a multiple of 8 and odd HW (full-extent block fallback).
    x, style, w, b, scale, lrmul = make_case(k3, N=1, C=3, S=8, H=7, W=5)
    out = jax.block_until_ready(adain_forward(x, style, w, b, scale, lrmul))
    ref = adain_reference(x, style, w, b, scale, lrmul)
    np.testing.assert_allclose(np.asarray(out), np.asarray(ref),
                               rtol=1e-5, atol=1e-5)

    print("KERNEL_OK")
</pallas_src>

<mosaic_0001>
module attributes {stable_mosaic.version = 11 : i64} {
  func.func @adain_kernel(%arg0: i32, %arg1: memref<8x256xf32, #tpu.memory_space<vmem>>, %arg2: memref<8x2xf32, #tpu.memory_space<vmem>>, %arg3: memref<8x256xf32, #tpu.memory_space<vmem>>) attributes {dimension_semantics = [#tpu.dimension_semantics<parallel>], iteration_bounds = array<i64: 1>, scalar_prefetch = 0 : i64, scratch_operands = 0 : i64, tpu.core_type = #tpu.core_type<tc>, window_params = [{transform_indices = @transform_0, window_bounds = array<i64: 8, 256>}, {transform_indices = @transform_1, window_bounds = array<i64: 8, 2>}, {transform_indices = @transform_2, window_bounds = array<i64: 8, 256>}]} {
    %c0 = arith.constant 0 : index
    %c0_0 = arith.constant 0 : index
    %0 = vector.load %arg1[%c0, %c0_0] : memref<8x256xf32, #tpu.memory_space<vmem>>, vector<8x256xf32>
    %cst = arith.constant dense<0.000000e+00> : vector<8xf32>
    %1 = vector.multi_reduction <add>, %0, %cst [1] : vector<8x256xf32> to vector<8xf32>
    %2 = vector.shape_cast %1 : vector<8xf32> to vector<8x1xf32>
    %3 = arith.mulf %0, %0 : vector<8x256xf32>
    %cst_1 = arith.constant dense<0.000000e+00> : vector<8xf32>
    %4 = vector.multi_reduction <add>, %3, %cst_1 [1] : vector<8x256xf32> to vector<8xf32>
    %5 = vector.shape_cast %4 : vector<8xf32> to vector<8x1xf32>
    %cst_2 = arith.constant 3.906250e-03 : f32
    %6 = vector.broadcast %cst_2 : f32 to vector<8x1xf32>
    %7 = arith.mulf %2, %6 : vector<8x1xf32>
    %cst_3 = arith.constant 3.906250e-03 : f32
    %8 = vector.broadcast %cst_3 : f32 to vector<8x1xf32>
    %9 = arith.mulf %5, %8 : vector<8x1xf32>
    %10 = arith.mulf %7, %7 : vector<8x1xf32>
    %11 = arith.subf %9, %10 : vector<8x1xf32>
    %cst_4 = arith.constant 0.000000e+00 : f32
    %12 = vector.broadcast %cst_4 : f32 to vector<8x1xf32>
    %13 = arith.maximumf %11, %12 : vector<8x1xf32>
    %cst_5 = arith.constant 9.99999974E-6 : f32
    %14 = vector.broadcast %cst_5 : f32 to vector<8x1xf32>
    %15 = arith.addf %13, %14 : vector<8x1xf32>
    %16 = math.rsqrt %15 : vector<8x1xf32>
    %c0_6 = arith.constant 0 : index
    %c0_7 = arith.constant 0 : index
    %17 = vector.load %arg2[%c0_6, %c0_7] : memref<8x2xf32, #tpu.memory_space<vmem>>, vector<8x1xf32>
    %18 = arith.mulf %16, %17 : vector<8x1xf32>
    %c0_8 = arith.constant 0 : index
    %c1 = arith.constant 1 : index
    %19 = vector.load %arg2[%c0_8, %c1] : memref<8x2xf32, #tpu.memory_space<vmem>>, vector<8x1xf32>
    %20 = arith.mulf %7, %18 : vector<8x1xf32>
    %21 = arith.subf %19, %20 : vector<8x1xf32>
    %c0_9 = arith.constant 0 : index
    %c0_10 = arith.constant 0 : index
    %22 = vector.load %arg1[%c0_9, %c0_10] : memref<8x256xf32, #tpu.memory_space<vmem>>, vector<8x256xf32>
    %23 = vector.broadcast %18 : vector<8x1xf32> to vector<8x256xf32>
    %24 = arith.mulf %22, %23 : vector<8x256xf32>
    %25 = vector.broadcast %21 : vector<8x1xf32> to vector<8x256xf32>
    %26 = arith.addf %24, %25 : vector<8x256xf32>
    %c0_11 = arith.constant 0 : index
    %c0_12 = arith.constant 0 : index
    %27 = vector.load %arg3[%c0_11, %c0_12] : memref<8x256xf32, #tpu.memory_space<vmem>>, vector<8x256xf32>
    tpu.vector_store %arg3[%c0_11, %c0_12], %26 {strides = array<i32>} : memref<8x256xf32, #tpu.memory_space<vmem>>, vector<8x256xf32>,
    return
  }
  func.func @transform_0(%arg0: i32) -> (i32, i32) {
    %c0_i32 = arith.constant 0 : i32
    %c0_i32_0 = arith.constant 0 : i32
    return %arg0, %c0_i32 : i32, i32
  }
  func.func @transform_1(%arg0: i32) -> (i32, i32) {
    %c0_i32 = arith.constant 0 : i32
    %c0_i32_0 = arith.constant 0 : i32
    return %arg0, %c0_i32 : i32, i32
  }
  func.func @transform_2(%arg0: i32) -> (i32, i32) {
    %c0_i32 = arith.constant 0 : i32
    %c0_i32_0 = arith.constant 0 : i32
    return %arg0, %c0_i32 : i32, i32
  }
}

</mosaic_0001>

<llo_original>
// kernel: tpu_custom_call.1
$region0: #{tpu_custom_call.1}
  #allocation0 [shape = 'u32[]', space=smem, size = 0x4, offset = 0x4, fixed_abs, tag = 'smem constant byte address 0x4 - core index']
  #allocation1 [shape = 'u32[144,128]{1,0:T(1,128)}', space=vmem, size = 0x12000, scoped, tag = 'internal scratch']
  %s0 = inlined_call_operand.hbm [shape: f32[8,256], index: 0, kind: input, shape index: {}]
  %s1 = inlined_call_operand.vmem [shape: f32[8,2], index: 1, kind: input, shape index: {}]
  %s2 = inlined_call_operand.hbm [shape: f32[8,256], index: 2, kind: output, shape index: {}]
  %s3 = sld [smem:[#allocation0]]
  $region22: #{tpu_custom_call.1} parent=0
    _
  %s5 = ssub.s32 1, %s3
  %s6 = scalar_select 0, %s5, %s3
  $region1: #{tpu_custom_call.1} parent=0
    #allocation2 [shape = 'u8[8192]{0}', space=vmem, size = 0x2000, scoped, tag = 'input window, operand 0, single buffered']
    #allocation3 [shape = 's32[1]{0}', space=sflag, size = 0x4, scoped, tag = 'scoped memory for tpu_custom_call.1']
    #allocation4 [shape = 's32[1]{0}', space=sflag, size = 0x4, scoped, tag = 'scoped memory for tpu_custom_call.1']
    #allocation5 [shape = 'u8[8192]{0}', space=vmem, size = 0x2000, scoped, tag = 'output window, operand 0, single buffered']
    %7 = vsyncpa [#allocation3], 0
    %8 = vsyncpa [#allocation4], 0
    // Predicated region
    $region2: #{tpu_custom_call.1} parent=1 // pred_check
      _
    $region3: #{tpu_custom_call.1} parent=1 // pred_check_branch
      %10 = sbr.rel (0) target = $region5
    $region4: #{tpu_custom_call.1} parent=1 // pred_region
      %s12 = ssub.s32 256, 256
      %13 = vsyncadd [#allocation3], %s12
      %s15 = sshll.u32 [#allocation2], 4
      %s16 = int_to_ptr.vmem [resolvable:$true] %s15
      %18 = dma.hbm_to_vmem [thread:$0]  %s0, 256, %s16, [#allocation3]
    $region5: #{tpu_custom_call.1} parent=1 // pred_fallthru
      _
    // Predicated region
    $region6: #{tpu_custom_call.1} parent=1 // pred_check
      _
    $region7: #{tpu_custom_call.1} parent=1 // pred_check_branch
      %20 = sbr.rel (0) target = $region9
    $region8: #{tpu_custom_call.1} parent=1 // pred_region
      _
    $region9: #{tpu_custom_call.1} parent=1 // pred_fallthru
      _
    // Predicated region
    $region10: #{tpu_custom_call.1} parent=1 // pred_check
      _
    $region11: #{tpu_custom_call.1} parent=1 // pred_check_branch
      %22 = sbr.rel (0) target = $region13
    $region12: #{tpu_custom_call.1} parent=1 // pred_region
      %23 = dma.done [#allocation3], 256
    $region13: #{tpu_custom_call.1} parent=1 // pred_fallthru
      _
    %v24 = vld [vmem:[#allocation2] sm:$0xff]
    %v25 = vld [vmem:[#allocation2 + $0x8] sm:$0xff]
    %v26 = vadd.f32 %v24, %v25
    %27 = vadd.xlane.f32.xlu0 %v26
    %v28 = vpop.xlane.xlu0 %27
    %v29 = vmul.f32 %v24, %v24
    %v30 = vmul.f32 %v25, %v25
    %v31 = vadd.f32 %v29, %v30
    %32 = vadd.xlane.f32.xlu0 %v31
    %v33 = vpop.xlane.xlu0 %32
    %v34 = vmul.f32 %v28, 0.00390625
    %v35 = vmul.f32 %v33, 0.00390625
    %v36 = vmul.f32 %v34, %v34
    %v37 = vsub.f32 %v35, %v36
    %v38 = vmax.f32 %v37, 0.0
    %v39 = vadd.f32 %v38, 1e-05
    %v40 = vrsqrt.pop %v39
    %v41 = vld [vmem:[%s1] sm:$0xff]
    %v42 = vmul.f32 %v40, %v41
    %v43 = vmul.f32 %v34, %v42
    %45 = vrot.lane.b32.xlu0 %v43, 1
    %v46 = vpop.permute.xlu0 %45
    %v48 = vsub.f32 %v41, %v46
    %50 = vset.pattern.permute.xlu0 0
    %51 = vperm.xlu0 %50, %v42
    %v52 = vpop.permute.xlu0 %51
    %v54 = vmul.f32 %v24, %v52
    %v55 = vmul.f32 %v25, %v52
    %57 = vset.pattern.permute.xlu0 1
    %58 = vperm.xlu0 %57, %v48
    %v59 = vpop.permute.xlu0 %58
    %v61 = vadd.f32 %v54, %v59
    %v62 = vadd.f32 %v55, %v59
    %63 = vst [vmem:[#allocation5] sm:$0xff] %v61
    %64 = vst [vmem:[#allocation5 + $0x8] sm:$0xff] %v62
    // Predicated region
    $region14: #{tpu_custom_call.1} parent=1 // pred_check
      _
    $region15: #{tpu_custom_call.1} parent=1 // pred_check_branch
      %66 = sbr.rel (0) target = $region17
    $region16: #{tpu_custom_call.1} parent=1 // pred_region
      %s68 = ssub.s32 256, 256
      %69 = vsyncadd [#allocation4], %s68
      %s71 = sshll.u32 [#allocation5], 4
      %s72 = int_to_ptr.vmem [resolvable:$true] %s71
      %74 = dma.vmem_to_hbm [thread:$0]  %s72, 256, %s2, [#allocation4]
    $region17: #{tpu_custom_call.1} parent=1 // pred_fallthru
      _
    // Predicated region
    $region18: #{tpu_custom_call.1} parent=1 // pred_check
      _
    $region19: #{tpu_custom_call.1} parent=1 // pred_check_branch
      %76 = sbr.rel (0) target = $region21
    $region20: #{tpu_custom_call.1} parent=1 // pred_region
      %77 = dma.done [#allocation4], 256
    $region21: #{tpu_custom_call.1} parent=1 // pred_fallthru
      _
    %78 = vsyncpa [#allocation3], 1
    %79 = vsyncpa [#allocation4], 1

</llo_original>
